<compile_context>
chip_gen: v5e
topology: v5e:2x2
jax: 0.10.0
libtpu: 0.0.40
codegen_flags: <defaults>
</compile_context>

<pallas_src>
import math

import jax
import jax.numpy as jnp
from jax.experimental import pallas as pl
from jax.experimental.pallas import tpu as pltpu

_MIB = 1024 * 1024
_SINGLE_BLOCK_BYTES = 1 * _MIB  # below this, one un-gridded block (no pipeline)


def make_positional_encoding(d_model: int, max_len: int = 500,
                             dtype=jnp.float32) -> jnp.ndarray:
    """Deterministic buffer construction, identical to the PyTorch __init__.
    Cast once here to the activation dtype (removes a per-call cast/copy)."""
    position = jnp.arange(0, max_len, dtype=jnp.float32)[:, None]            # (max_len, 1)
    div_term = jnp.exp(
        jnp.arange(0, d_model, 2, dtype=jnp.float32) * (-math.log(10000.0) / d_model)
    )                                                                         # (ceil(D/2),)
    pe = jnp.zeros((max_len, d_model), dtype=jnp.float32)
    pe = pe.at[:, 0::2].set(jnp.sin(position * div_term))
    if d_model % 2 == 1:
        pe = pe.at[:, 1::2].set(jnp.cos(position * div_term[:-1]))
    else:
        pe = pe.at[:, 1::2].set(jnp.cos(position * div_term))
    return pe[None, :, :].astype(dtype)                                       # (1, max_len, d_model)


def _add_pe_kernel(x_ref, pe_ref, o_ref):
    # pe block has size-1 leading dim(s); jnp broadcasting handles the row/batch
    # broadcast.  Pure VPU streaming add, HBM-bandwidth bound.
    o_ref[...] = (x_ref[...] + pe_ref[...]).astype(o_ref.dtype)


def _round_up(v: int, m: int) -> int:
    return ((v + m - 1) // m) * m


def _round_down(v: int, m: int) -> int:
    return (v // m) * m


def _chip_params():
    """Returns (target_tile_bytes, vmem_ceiling_bytes), chip aware."""
    cap = 64 * _MIB  # conservative default (v7x has 64 MiB VMEM / TC)
    try:
        info = pltpu.get_tpu_info()
        c = getattr(info, "vmem_capacity_bytes", None)
        if c:
            cap = int(c)
    except Exception:
        pass
    if cap >= 128 * _MIB:            # v5e / v6e: room for bigger tiles
        return 4 * _MIB, 64 * _MIB
    return 2 * _MIB, 32 * _MIB       # v7x (64 MiB physical): keep headroom


def _vmem_limit(block_elems: int, pe_block_elems: int, elem_bytes: int,
                ceiling: int) -> int:
    # double-buffered x-in + out tiles, double-buffered pe tile, 2x headroom
    need = (4 * block_elems + 2 * pe_block_elems) * elem_bytes
    return int(min(max(2 * need, 16 * _MIB), ceiling))


def _single_block_call(x, pe_b):
    """Whole array in one un-gridded block: no multi-step DMA pipeline."""
    return pl.pallas_call(
        _add_pe_kernel,
        out_shape=jax.ShapeDtypeStruct(x.shape, x.dtype),
        compiler_params=pltpu.CompilerParams(vmem_limit_bytes=16 * _MIB),
    )(x, pe_b)


def _add_pe_2d(x2: jnp.ndarray, pe2: jnp.ndarray) -> jnp.ndarray:
    """Lane-dense path. x2: (R, F) with F % 128 == 0; pe2: (1, F)."""
    R, F = x2.shape
    elem = x2.dtype.itemsize
    total = R * F * elem
    target, ceiling = _chip_params()

    if total <= _SINGLE_BLOCK_BYTES:
        return _single_block_call(x2, pe2)

    sub = max(8, 32 // elem)              # sublane packing: 8 f32 / 16 bf16 / 32 int8
    row_bytes = F * elem
    rows_fit = target // row_bytes
    if rows_fit >= sub:
        # Full rows fit in the byte target: grow the row tile first, keep F whole.
        Bt = min(R, _round_down(rows_fit, sub))
        Ft = F
    else:
        # Even one sublane-group of rows exceeds the target: split the lane axis.
        Bt = min(R, sub)
        Ft = min(F, max(128, _round_down(target // (Bt * elem), 128)))

    # Guarantee >= 2 blocks so megacore sharding can use both v7x TensorCores.
    if pl.cdiv(R, Bt) * pl.cdiv(F, Ft) < 2:
        if R > sub:
            Bt = max(sub, _round_up(pl.cdiv(R, 2), sub))
        elif F >= 256:
            Ft = max(128, _round_down(F // 2, 128))

    # Row axis innermost: the pe block index (0, j) is unchanged between
    # consecutive grid steps, so Pallas does not re-DMA the pe tile.
    grid = (pl.cdiv(F, Ft), pl.cdiv(R, Bt))

    return pl.pallas_call(
        _add_pe_kernel,
        out_shape=jax.ShapeDtypeStruct((R, F), x2.dtype),
        grid_spec=pltpu.PrefetchScalarGridSpec(
            num_scalar_prefetch=0,
            grid=grid,
            in_specs=[
                pl.BlockSpec((Bt, Ft), lambda j, i: (i, j)),   # x tile
                pl.BlockSpec((1, Ft), lambda j, i: (0, j)),    # pe tile (row broadcast)
            ],
            out_specs=pl.BlockSpec((Bt, Ft), lambda j, i: (i, j)),
        ),
        compiler_params=pltpu.CompilerParams(
            dimension_semantics=("parallel", "parallel"),
            vmem_limit_bytes=_vmem_limit(Bt * Ft, Ft, elem, ceiling),
        ),
    )(x2, pe2)


def _add_pe_3d(x: jnp.ndarray, pe3: jnp.ndarray) -> jnp.ndarray:
    """Non-lane-aligned path. x: (B, S, D); pe3: (1, S, D).

    D is NOT padded: the block covers the full D (full-dim exception), so the
    only cost is a masked store on the D tail instead of 2-3 extra HBM passes
    for pad + slice."""
    B, S, D = x.shape
    elem = x.dtype.itemsize
    total = B * S * D * elem
    target, ceiling = _chip_params()

    if total <= _SINGLE_BLOCK_BYTES:
        return _single_block_call(x, pe3)

    sub = max(8, 32 // elem)
    row_bytes = D * elem
    St = min(S, max(sub, _round_down(max(target // row_bytes, sub), sub)))
    if St != S:
        St = max(sub, _round_down(St, sub))      # sublane dim: multiple of 8 or full S

    # Ensure >= 2 blocks when there is only one batch element.
    if B == 1 and pl.cdiv(S, St) < 2 and S > sub:
        St = max(sub, _round_up(pl.cdiv(S, 2), sub))

    # Batch axis innermost: pe block index (0, s, 0) unchanged across batches.
    grid = (pl.cdiv(S, St), B)

    return pl.pallas_call(
        _add_pe_kernel,
        out_shape=jax.ShapeDtypeStruct((B, S, D), x.dtype),
        grid_spec=pltpu.PrefetchScalarGridSpec(
            num_scalar_prefetch=0,
            grid=grid,
            in_specs=[
                pl.BlockSpec((1, St, D), lambda s, b: (b, s, 0)),   # x tile
                pl.BlockSpec((1, St, D), lambda s, b: (0, s, 0)),   # pe tile (batch broadcast)
            ],
            out_specs=pl.BlockSpec((1, St, D), lambda s, b: (b, s, 0)),
        ),
        compiler_params=pltpu.CompilerParams(
            dimension_semantics=("parallel", "parallel"),
            vmem_limit_bytes=_vmem_limit(St * D, St * D, elem, ceiling),
        ),
    )(x, pe3)


def positional_encoding_forward(x: jnp.ndarray, pe: jnp.ndarray) -> jnp.ndarray:
    """x: (B, S, D); pe: (1, max_len, D). Returns x + pe[:, :S, :]."""
    B, S, D = x.shape
    pe_slice = pe[0, :S, :]
    if pe_slice.dtype != x.dtype:
        pe_slice = pe_slice.astype(x.dtype)

    F = S * D
    if F % 128 == 0:
        # Free lane-dense view: flatten (S, D) -> F lanes (multiple of 128).
        out2 = _add_pe_2d(x.reshape(B, F), pe_slice.reshape(1, F))
        return out2.reshape(B, S, D)

    # Non-128-aligned S*D (e.g. odd D): keep (B, S, D), full-D blocks, no padding.
    return _add_pe_3d(x, pe_slice[None])


if __name__ == "__main__":
    # Shapes consistent with the module: batch=2, seq=8, d_model=32.
    B, S, D = 2, 8, 32
    key = jax.random.PRNGKey(0)
    x = jax.random.normal(key, (B, S, D), dtype=jnp.float32)
    pe = make_positional_encoding(d_model=D, max_len=500, dtype=jnp.float32)

    fwd = jax.jit(positional_encoding_forward)
    out = jax.block_until_ready(fwd(x, pe))
    ref = x + pe[:, :S, :]
    assert out.shape == (B, S, D)
    assert jnp.allclose(out, ref, atol=1e-6), "mismatch vs reference (tiny single-block path)"

    # Larger shape: exercises the tiled, pipelined, lane-dense path.
    B2, S2, D2 = 8, 500, 256
    x2 = jax.random.normal(jax.random.PRNGKey(1), (B2, S2, D2), dtype=jnp.float32)
    pe2 = make_positional_encoding(d_model=D2, max_len=500, dtype=jnp.float32)
    out2 = jax.block_until_ready(fwd(x2, pe2))
    ref2 = x2 + pe2[:, :S2, :]
    assert jnp.allclose(out2, ref2, atol=1e-6), "mismatch vs reference (tiled path)"

    # Non-128-aligned d_model: exercises the (B, S, D) full-D masked path.
    D3 = 33
    x3 = jax.random.normal(jax.random.PRNGKey(2), (B, S, D3), dtype=jnp.float32)
    pe3 = make_positional_encoding(d_model=D3, max_len=500, dtype=jnp.float32)
    out3 = jax.block_until_ready(fwd(x3, pe3))
    ref3 = x3 + pe3[:, :S, :]
    assert jnp.allclose(out3, ref3, atol=1e-6), "mismatch vs reference (full-D path)"

    print("KERNEL_OK")
</pallas_src>

<mosaic_0001>
module attributes {stable_mosaic.version = 11 : i64} {
  func.func @_add_pe_kernel(%arg0: memref<2x256xf32, #tpu.memory_space<vmem>>, %arg1: memref<1x256xf32, #tpu.memory_space<vmem>>, %arg2: memref<2x256xf32, #tpu.memory_space<vmem>>) attributes {dimension_semantics = [], scalar_prefetch = 0 : i64, scratch_operands = 0 : i64, tpu.core_type = #tpu.core_type<tc>} {
    %c0 = arith.constant 0 : index
    %c0_0 = arith.constant 0 : index
    %0 = vector.load %arg0[%c0, %c0_0] : memref<2x256xf32, #tpu.memory_space<vmem>>, vector<2x256xf32>
    %c0_1 = arith.constant 0 : index
    %c0_2 = arith.constant 0 : index
    %1 = vector.load %arg1[%c0_1, %c0_2] : memref<1x256xf32, #tpu.memory_space<vmem>>, vector<1x256xf32>
    %2 = vector.broadcast %1 : vector<1x256xf32> to vector<2x256xf32>
    %3 = arith.addf %0, %2 : vector<2x256xf32>
    %c0_3 = arith.constant 0 : index
    %c0_4 = arith.constant 0 : index
    %4 = vector.load %arg2[%c0_3, %c0_4] : memref<2x256xf32, #tpu.memory_space<vmem>>, vector<2x256xf32>
    tpu.vector_store %arg2[%c0_3, %c0_4], %3 {strides = array<i32>} : memref<2x256xf32, #tpu.memory_space<vmem>>, vector<2x256xf32>,
    return
  }
}

</mosaic_0001>

<llo_original>
// kernel: squeeze.1
$region0: #{squeeze.1}
  %s0 = inlined_call_operand.vmem [shape: f32[1,8,32], index: 0, kind: input, shape index: {}]
  %s1 = inlined_call_operand.vmem [shape: f32[1,256], index: 1, kind: output, shape index: {}]
  $region1: #{squeeze.1} parent=0
    #allocation0 [shape = 'u8[8192]{0}', space=vmem, size = 0x2000, scoped, tag = 'scoped mem for output reshape']
    %s2 = smov 3
    %v3 = vld [vmem:[%s0] ss:$4 sm:%s2]
    %vm4 = vcmask 261120
    %5 = vst.msk [vmem:[#allocation0] ss:$8 sm:$0x3] %vm4, %v3
    %s6 = scalar_lea.vmem %s0, 3
    %s7 = smov 3
    %v8 = vld [vmem:[%s6] ss:$4 sm:%s7]
    %9 = vrot.lane.b32.xlu0 %v8, 96
    %v10 = vpop.permute.xlu0 %9
    %vm11 = vcmask 1048320
    %12 = vst.msk [vmem:[#allocation0] ss:$8 sm:$0x3] %vm11, %v10
    %s13 = scalar_lea.vmem %s0, 2
    %s14 = smov 3
    %v15 = vld [vmem:[%s13] ss:$4 sm:%s14]
    %16 = vrot.lane.b32.xlu0 %v15, 64
    %v17 = vpop.permute.xlu0 %16
    %vm18 = vcmask 785920
    %19 = vst.msk [vmem:[#allocation0] ss:$8 sm:$0x3] %vm18, %v17
    %s20 = scalar_lea.vmem %s0, 1
    %s21 = smov 3
    %v22 = vld [vmem:[%s20] ss:$4 sm:%s21]
    %23 = vrot.lane.b32.xlu0 %v22, 32
    %v24 = vpop.permute.xlu0 %23
    %vm25 = vcmask 523520
    %26 = vst.msk [vmem:[#allocation0] ss:$8 sm:$0x3] %vm25, %v24
    %s28 = ssub.s32 2, 1
    %v29 = vld [vmem:[#allocation0] sm:%s28]
    %s31 = ssub.s32 2, 1
    %32 = vst [vmem:[%s1] sm:%s31] %v29
    %s33 = scalar_lea.vmem [#allocation0], 8
    %v34 = vld [vmem:[%s33] sm:%s28]
    %s36 = ssub.s32 2, 1
    %s37 = scalar_lea.vmem %s1, 1
    %38 = vst [vmem:[%s37] sm:%s36] %v34

// kernel: positional_encoding_forward.1
$region0: #{positional_encoding_forward.1}
  #allocation0 [shape = 'u32[]', space=smem, size = 0x4, offset = 0x4, fixed_abs, tag = 'smem constant byte address 0x4 - core index']
  #allocation1 [shape = 'u32[72,128]{1,0:T(1,128)}', space=vmem, size = 0x9000, scoped, tag = 'internal scratch']
  %s0 = inlined_call_operand.vmem [shape: f32[2,256], index: 0, kind: input, shape index: {}]
  %s1 = inlined_call_operand.vmem [shape: f32[1,256], index: 1, kind: input, shape index: {}]
  %s2 = inlined_call_operand.vmem [shape: f32[2,256], index: 2, kind: output, shape index: {}]
  %s3 = sld [smem:[#allocation0]]
  $region18: #{positional_encoding_forward.1} parent=0
    _
  %s5 = ssub.s32 1, %s3
  %s6 = scalar_select 0, %s5, %s3
  // Predicated region
  $region2: #{positional_encoding_forward.1} parent=0 // pred_check
    _
  $region3: #{positional_encoding_forward.1} parent=0 // pred_check_branch
    %8 = sbr.rel (0) target = $region5
  $region4: #{positional_encoding_forward.1} parent=0 // pred_region
    _
  $region5: #{positional_encoding_forward.1} parent=0 // pred_fallthru
    _
  // Predicated region
  $region6: #{positional_encoding_forward.1} parent=0 // pred_check
    _
  $region7: #{positional_encoding_forward.1} parent=0 // pred_check_branch
    %10 = sbr.rel (0) target = $region9
  $region8: #{positional_encoding_forward.1} parent=0 // pred_region
    _
  $region9: #{positional_encoding_forward.1} parent=0 // pred_fallthru
    _
  %v11 = vld [vmem:[%s0] sm:$0xf]
  %v12 = vld [vmem:[%s1] sm:$0x3]
  %v14 = vperm.slane %v12, 0
  %v15 = vperm.slane %v12, 1
  %v16 = vrot.slane %v15, 6
  %vm17 = vcmask 1041408
  %v18 = vsel %vm17, %v14, %v16
  %v20 = vadd.f32 %v11, %v18
  %21 = vst [vmem:[%s2] sm:$0xf] %v20
  // Predicated region
  $region10: #{positional_encoding_forward.1} parent=0 // pred_check
    _
  $region11: #{positional_encoding_forward.1} parent=0 // pred_check_branch
    %23 = sbr.rel (0) target = $region13
  $region12: #{positional_encoding_forward.1} parent=0 // pred_region
    _
  $region13: #{positional_encoding_forward.1} parent=0 // pred_fallthru
    _
  // Predicated region
  $region14: #{positional_encoding_forward.1} parent=0 // pred_check
    _
  $region15: #{positional_encoding_forward.1} parent=0 // pred_check_branch
    %25 = sbr.rel (0) target = $region17
  $region16: #{positional_encoding_forward.1} parent=0 // pred_region
    _
  $region17: #{positional_encoding_forward.1} parent=0 // pred_fallthru
    _

</llo_original>
